<compile_context>
chip_gen: v7x
topology: tpu7x:2x2x1
jax: 0.10.0
libtpu: 0.0.40
codegen_flags: <defaults>
</compile_context>

<pallas_src>
import jax
import jax.numpy as jnp
from jax.experimental import pallas as pl
from jax.experimental.pallas import tpu as pltpu


def _round_up(n: int, m: int) -> int:
    return ((n + m - 1) // m) * m


# ---------------------------------------------------------------------------
# Parameter prep (done ONCE, outside the per-step path).
#   w_in : [I, H] -> [Ip, Hp]   (PyTorch weight [H, I] already pre-transposed)
#   w_h  : [H, H] -> [Hp, Hp]
#   b_in : [1, H] -> [1,  Hp]
# Padded rows/cols are zero, so padded hidden *columns* of the output stay
# exactly tanh(0) = 0 and can be carried safely through the recurrence.
# (Padded batch rows become tanh(b) but never contaminate real rows — matmul
# rows are independent — and they are sliced away on output.)
# ---------------------------------------------------------------------------
def prepare_params(w_in, w_h, b_in):
    I, H = w_in.shape
    Ip = _round_up(I, 128)
    Hp = _round_up(H, 128)
    f32 = jnp.float32
    w_in_pad = jnp.zeros((Ip, Hp), f32).at[:I, :H].set(w_in.astype(f32))
    w_h_pad = jnp.zeros((Hp, Hp), f32).at[:H, :H].set(w_h.astype(f32))
    b_pad = jnp.zeros((1, Hp), f32).at[:, :H].set(b_in.astype(f32))
    return w_in_pad, w_h_pad, b_pad


# ---------------------------------------------------------------------------
# Single-step cell kernel: two MXU dots (f32 accumulate) + f32 bias/tanh
# epilogue, lane-dense unmasked store.
# ---------------------------------------------------------------------------
def rnn_cell_kernel(x_ref, h_ref, w_in_ref, w_h_ref, b_ref, out_ref):
    acc = jnp.dot(x_ref[...], w_in_ref[...], preferred_element_type=jnp.float32)
    acc = acc + jnp.dot(h_ref[...], w_h_ref[...], preferred_element_type=jnp.float32)
    out_ref[...] = jnp.tanh(acc + b_ref[...])   # b is [1, Hp], broadcasts over batch


@jax.jit
def rnn_cell_forward(x, h, w_in_pad, w_h_pad, b_pad):
    """One RNNCell step.  Returns (output, new_state); new_state is output."""
    B, I = x.shape
    H = h.shape[1]
    Ip, Hp = w_in_pad.shape
    Bp = _round_up(B, 8)          # f32 sublane multiple
    f32 = jnp.float32

    # Small pad ops; fused by XLA around the custom call (jit'ed wrapper).
    x_pad = jnp.zeros((Bp, Ip), f32).at[:B, :I].set(x.astype(f32))
    h_pad = jnp.zeros((Bp, Hp), f32).at[:B, :H].set(h.astype(f32))

    out_pad = pl.pallas_call(
        rnn_cell_kernel,
        out_shape=jax.ShapeDtypeStruct((Bp, Hp), f32),
        # Whole arrays resident in VMEM, single grid point (tiny sizes).
        in_specs=[
            pl.BlockSpec(memory_space=pltpu.MemorySpace.VMEM),  # x
            pl.BlockSpec(memory_space=pltpu.MemorySpace.VMEM),  # h
            pl.BlockSpec(memory_space=pltpu.MemorySpace.VMEM),  # w_in
            pl.BlockSpec(memory_space=pltpu.MemorySpace.VMEM),  # w_h
            pl.BlockSpec(memory_space=pltpu.MemorySpace.VMEM),  # bias
        ],
        out_specs=pl.BlockSpec(memory_space=pltpu.MemorySpace.VMEM),
    )(x_pad, h_pad, w_in_pad, w_h_pad, b_pad)

    out = out_pad[:B, :H].astype(x.dtype)
    return out, out


# ---------------------------------------------------------------------------
# Whole-sequence kernel: grid=(T,), weights/bias/h0 VMEM-resident (constant
# index_map), hidden state carried in a persistent VMEM scratch, x_t streamed
# per grid step.  Each grid step is exactly the reference cell forward.
# ---------------------------------------------------------------------------
def rnn_seq_kernel(x_ref, h0_ref, w_in_ref, w_h_ref, b_ref, out_ref, h_scratch):
    t = pl.program_id(0)

    @pl.when(t == 0)
    def _():
        h_scratch[...] = h0_ref[...]

    acc = jnp.dot(x_ref[...], w_in_ref[...], preferred_element_type=jnp.float32)
    acc = acc + jnp.dot(h_scratch[...], w_h_ref[...],
                        preferred_element_type=jnp.float32)
    h_new = jnp.tanh(acc + b_ref[...])
    h_scratch[...] = h_new
    out_ref[...] = h_new


@jax.jit
def rnn_sequence_forward(xs, h0, w_in_pad, w_h_pad, b_pad):
    """Apply the RNNCell over a [T, B, I] sequence inside ONE pallas_call.

    Returns (outputs [T, B, H], final_state [B, H]).
    """
    T, B, I = xs.shape
    H = h0.shape[1]
    Ip, Hp = w_in_pad.shape
    Bp = _round_up(B, 8)
    f32 = jnp.float32

    # Padded once per sequence call (amortized over all T steps).
    xs_pad = jnp.zeros((T, Bp, Ip), f32).at[:, :B, :I].set(xs.astype(f32))
    h0_pad = jnp.zeros((Bp, Hp), f32).at[:B, :H].set(h0.astype(f32))

    outs_pad = pl.pallas_call(
        rnn_seq_kernel,
        out_shape=jax.ShapeDtypeStruct((T, Bp, Hp), f32),
        grid_spec=pltpu.PrefetchScalarGridSpec(
            num_scalar_prefetch=0,
            grid=(T,),
            in_specs=[
                # x_t streamed per step; leading time dim squeezed away.
                pl.BlockSpec((None, Bp, Ip), lambda t: (t, 0, 0)),
                # h0 / weights / bias: constant index_map => VMEM-resident,
                # DMA'd once for the whole sequence.
                pl.BlockSpec((Bp, Hp), lambda t: (0, 0)),
                pl.BlockSpec((Ip, Hp), lambda t: (0, 0)),
                pl.BlockSpec((Hp, Hp), lambda t: (0, 0)),
                pl.BlockSpec((1, Hp), lambda t: (0, 0)),
            ],
            out_specs=pl.BlockSpec((None, Bp, Hp), lambda t: (t, 0, 0)),
            # Hidden state carried across grid iterations.
            scratch_shapes=[pltpu.VMEM((Bp, Hp), f32)],
        ),
        compiler_params=pltpu.CompilerParams(
            dimension_semantics=("arbitrary",),   # time axis is sequential
        ),
    )(xs_pad, h0_pad, w_in_pad, w_h_pad, b_pad)

    outs = outs_pad[:, :B, :H].astype(xs.dtype)
    return outs, outs[-1]


if __name__ == "__main__":
    batch = 8
    input_size = 16
    hidden_size = 32
    seq_len = 8

    key = jax.random.PRNGKey(0)
    k_x, k_xs, k_wi, k_bi, k_wh, k_h = jax.random.split(key, 6)

    # PyTorch-style uniform(-1/sqrt(fan_in), 1/sqrt(fan_in)) init.
    bound_in = 1.0 / jnp.sqrt(jnp.float32(input_size))
    bound_h = 1.0 / jnp.sqrt(jnp.float32(hidden_size))
    w_in = jax.random.uniform(k_wi, (input_size, hidden_size),
                              minval=-bound_in, maxval=bound_in, dtype=jnp.float32)
    b_in = jax.random.uniform(k_bi, (1, hidden_size),
                              minval=-bound_in, maxval=bound_in, dtype=jnp.float32)
    w_h = jax.random.uniform(k_wh, (hidden_size, hidden_size),
                             minval=-bound_h, maxval=bound_h, dtype=jnp.float32)

    # One-time parameter prep (fused, zero-padded, lane-dense slabs).
    w_in_pad, w_h_pad, b_pad = jax.block_until_ready(
        prepare_params(w_in, w_h, b_in))

    x = jax.random.normal(k_x, (batch, input_size), dtype=jnp.float32)
    h0 = jnp.zeros((batch, hidden_size), dtype=jnp.float32)   # RNNCell.init

    # --- single step, zero state -------------------------------------------
    output, new_state = rnn_cell_forward(x, h0, w_in_pad, w_h_pad, b_pad)
    jax.block_until_ready(output)
    ref = jnp.tanh(x @ w_in + b_in + h0 @ w_h)
    assert jnp.allclose(output, ref, atol=1e-5), "single-step mismatch (zero state)"
    assert jnp.array_equal(output, new_state)

    # --- single step, non-zero state ---------------------------------------
    h1 = jax.random.normal(k_h, (batch, hidden_size), dtype=jnp.float32)
    out2, _ = rnn_cell_forward(x, h1, w_in_pad, w_h_pad, b_pad)
    jax.block_until_ready(out2)
    ref2 = jnp.tanh(x @ w_in + b_in + h1 @ w_h)
    assert jnp.allclose(out2, ref2, atol=1e-5), "single-step mismatch (nonzero state)"

    # --- full T-step recurrence in one pallas_call --------------------------
    xs = jax.random.normal(k_xs, (seq_len, batch, input_size), dtype=jnp.float32)
    outs, h_last = rnn_sequence_forward(xs, h0, w_in_pad, w_h_pad, b_pad)
    jax.block_until_ready(outs)
    jax.block_until_ready(h_last)

    def _scan_step(h, x_t):
        h_new = jnp.tanh(x_t @ w_in + b_in + h @ w_h)
        return h_new, h_new

    h_ref_last, outs_ref = jax.lax.scan(_scan_step, h0, xs)
    assert jnp.allclose(outs, outs_ref, atol=1e-4), "sequence mismatch vs scan reference"
    assert jnp.allclose(h_last, h_ref_last, atol=1e-4), "final-state mismatch"

    print("KERNEL_OK")
</pallas_src>

<mosaic_0001>
module attributes {stable_mosaic.version = 11 : i64} {
  func.func @rnn_cell_kernel(%arg0: memref<8x128xf32, #tpu.memory_space<vmem>>, %arg1: memref<8x128xf32, #tpu.memory_space<vmem>>, %arg2: memref<128x128xf32, #tpu.memory_space<vmem>>, %arg3: memref<128x128xf32, #tpu.memory_space<vmem>>, %arg4: memref<1x128xf32, #tpu.memory_space<vmem>>, %arg5: memref<8x128xf32, #tpu.memory_space<vmem>>) attributes {dimension_semantics = [], scalar_prefetch = 0 : i64, scratch_operands = 0 : i64, tpu.core_type = #tpu.core_type<tc>} {
    %c0 = arith.constant 0 : index
    %c0_0 = arith.constant 0 : index
    %0 = vector.load %arg0[%c0, %c0_0] : memref<8x128xf32, #tpu.memory_space<vmem>>, vector<8x128xf32>
    %c0_1 = arith.constant 0 : index
    %c0_2 = arith.constant 0 : index
    %1 = vector.load %arg2[%c0_1, %c0_2] : memref<128x128xf32, #tpu.memory_space<vmem>>, vector<128x128xf32>
    %cst = arith.constant dense<0.000000e+00> : vector<8x128xf32>
    %2 = tpu.matmul %0, %1, %cst {dimension_numbers = #tpu.dot_dimension_numbers<[1], [0], [0], [1], [0, 0, 1, 1], [], []>} : vector<8x128xf32>, vector<128x128xf32>, vector<8x128xf32> -> vector<8x128xf32>
    %c0_3 = arith.constant 0 : index
    %c0_4 = arith.constant 0 : index
    %3 = vector.load %arg1[%c0_3, %c0_4] : memref<8x128xf32, #tpu.memory_space<vmem>>, vector<8x128xf32>
    %c0_5 = arith.constant 0 : index
    %c0_6 = arith.constant 0 : index
    %4 = vector.load %arg3[%c0_5, %c0_6] : memref<128x128xf32, #tpu.memory_space<vmem>>, vector<128x128xf32>
    %cst_7 = arith.constant dense<0.000000e+00> : vector<8x128xf32>
    %5 = tpu.matmul %3, %4, %cst_7 {dimension_numbers = #tpu.dot_dimension_numbers<[1], [0], [0], [1], [0, 0, 1, 1], [], []>} : vector<8x128xf32>, vector<128x128xf32>, vector<8x128xf32> -> vector<8x128xf32>
    %6 = arith.addf %2, %5 : vector<8x128xf32>
    %c0_8 = arith.constant 0 : index
    %c0_9 = arith.constant 0 : index
    %7 = vector.load %arg4[%c0_8, %c0_9] : memref<1x128xf32, #tpu.memory_space<vmem>>, vector<1x128xf32>
    %8 = vector.broadcast %7 : vector<1x128xf32> to vector<8x128xf32>
    %9 = arith.addf %6, %8 : vector<8x128xf32>
    %10 = math.tanh %9 : vector<8x128xf32>
    %c0_10 = arith.constant 0 : index
    %c0_11 = arith.constant 0 : index
    %11 = vector.load %arg5[%c0_10, %c0_11] : memref<8x128xf32, #tpu.memory_space<vmem>>, vector<8x128xf32>
    tpu.vector_store %arg5[%c0_10, %c0_11], %10 {strides = array<i32>} : memref<8x128xf32, #tpu.memory_space<vmem>>, vector<8x128xf32>,
    return
  }
}

</mosaic_0001>

<llo_original>
// kernel: rnn_cell_forward.1
$region0: #{rnn_cell_forward.1}
  #allocation0 [shape = 'u32[]', space=smem, size = 0x4, offset = 0x4, fixed_abs, tag = 'smem constant byte address 0x4 - core index']
  #allocation1 [shape = 'u32[144,128]{1,0:T(1,128)}', space=vmem, size = 0x12000, scoped, tag = 'internal scratch']
  %s0 = inlined_call_operand.vmem [shape: f32[8,128], index: 0, kind: input, shape index: {}]
  %s1 = inlined_call_operand.vmem [shape: f32[8,128], index: 1, kind: input, shape index: {}]
  %s2 = inlined_call_operand.hbm [shape: f32[128,128], index: 2, kind: input, shape index: {}]
  %s3 = inlined_call_operand.hbm [shape: f32[128,128], index: 3, kind: input, shape index: {}]
  %s4 = inlined_call_operand.vmem [shape: f32[1,128], index: 4, kind: input, shape index: {}]
  %s5 = inlined_call_operand.vmem [shape: f32[8,128], index: 5, kind: output, shape index: {}]
  %s6 = sld [smem:[#allocation0]]
  $region38: #{rnn_cell_forward.1} parent=0
    _
  %s8 = ssub.s32 1, %s6
  %s9 = scalar_select 0, %s8, %s6
  $region1: #{rnn_cell_forward.1} parent=0
    #allocation2 [shape = 'u8[65536]{0}', space=vmem, size = 0x10000, scoped, tag = 'input window, operand 2, single buffered']
    #allocation3 [shape = 's32[1]{0}', space=sflag, size = 0x4, scoped, tag = 'scoped memory for rnn_cell_forward.1']
    #allocation4 [shape = 'u8[65536]{0}', space=vmem, size = 0x10000, scoped, tag = 'input window, operand 3, single buffered']
    #allocation5 [shape = 's32[1]{0}', space=sflag, size = 0x4, scoped, tag = 'scoped memory for rnn_cell_forward.1']
    %10 = vsyncpa [#allocation3], 0
    %11 = vsyncpa [#allocation5], 0
    // Predicated region
    $region2: #{rnn_cell_forward.1} parent=1 // pred_check
      _
    $region3: #{rnn_cell_forward.1} parent=1 // pred_check_branch
      %13 = sbr.rel (0) target = $region5
    $region4: #{rnn_cell_forward.1} parent=1 // pred_region
      _
    $region5: #{rnn_cell_forward.1} parent=1 // pred_fallthru
      _
    // Predicated region
    $region6: #{rnn_cell_forward.1} parent=1 // pred_check
      _
    $region7: #{rnn_cell_forward.1} parent=1 // pred_check_branch
      %15 = sbr.rel (0) target = $region9
    $region8: #{rnn_cell_forward.1} parent=1 // pred_region
      _
    $region9: #{rnn_cell_forward.1} parent=1 // pred_fallthru
      _
    // Predicated region
    $region10: #{rnn_cell_forward.1} parent=1 // pred_check
      _
    $region11: #{rnn_cell_forward.1} parent=1 // pred_check_branch
      %17 = sbr.rel (0) target = $region13
    $region12: #{rnn_cell_forward.1} parent=1 // pred_region
      %s19 = ssub.s32 2048, 2048
      %20 = vsyncadd [#allocation3], %s19
      %s21 = sshll.u32 [#allocation2], 4
      %s22 = int_to_ptr.vmem [resolvable:$true] %s21
      %27 = dma.hbm_to_vmem [thread:$0]  %s2, 2048, %s22, [#allocation3], 128, 128, 8
    $region13: #{rnn_cell_forward.1} parent=1 // pred_fallthru
      _
    // Predicated region
    $region14: #{rnn_cell_forward.1} parent=1 // pred_check
      _
    $region15: #{rnn_cell_forward.1} parent=1 // pred_check_branch
      %29 = sbr.rel (0) target = $region17
    $region16: #{rnn_cell_forward.1} parent=1 // pred_region
      %s31 = ssub.s32 2048, 2048
      %32 = vsyncadd [#allocation5], %s31
      %s33 = sshll.u32 [#allocation4], 4
      %s34 = int_to_ptr.vmem [resolvable:$true] %s33
      %39 = dma.hbm_to_vmem [thread:$0]  %s3, 2048, %s34, [#allocation5], 128, 128, 8
    $region17: #{rnn_cell_forward.1} parent=1 // pred_fallthru
      _
    // Predicated region
    $region18: #{rnn_cell_forward.1} parent=1 // pred_check
      _
    $region19: #{rnn_cell_forward.1} parent=1 // pred_check_branch
      %41 = sbr.rel (0) target = $region21
    $region20: #{rnn_cell_forward.1} parent=1 // pred_region
      _
    $region21: #{rnn_cell_forward.1} parent=1 // pred_fallthru
      _
    // Predicated region
    $region22: #{rnn_cell_forward.1} parent=1 // pred_check
      _
    $region23: #{rnn_cell_forward.1} parent=1 // pred_check_branch
      %43 = sbr.rel (0) target = $region25
    $region24: #{rnn_cell_forward.1} parent=1 // pred_region
      %44 = dma.done [#allocation3], 2048
    $region25: #{rnn_cell_forward.1} parent=1 // pred_fallthru
      _
    // Predicated region
    $region26: #{rnn_cell_forward.1} parent=1 // pred_check
      _
    $region27: #{rnn_cell_forward.1} parent=1 // pred_check_branch
      %46 = sbr.rel (0) target = $region29
    $region28: #{rnn_cell_forward.1} parent=1 // pred_region
      %47 = dma.done [#allocation5], 2048
    $region29: #{rnn_cell_forward.1} parent=1 // pred_fallthru
      _
    %v48 = vld [vmem:[%s0] sm:$0xff]
    %v49 = vld [vmem:[#allocation2] sm:$0xff]
    %v50 = vld [vmem:[#allocation2 + $0x8] sm:$0xff]
    %v51 = vld [vmem:[#allocation2 + $0x10] sm:$0xff]
    %v52 = vld [vmem:[#allocation2 + $0x18] sm:$0xff]
    %v53 = vld [vmem:[#allocation2 + $0x20] sm:$0xff]
    %v54 = vld [vmem:[#allocation2 + $0x28] sm:$0xff]
    %v55 = vld [vmem:[#allocation2 + $0x30] sm:$0xff]
    %v56 = vld [vmem:[#allocation2 + $0x38] sm:$0xff]
    %v57 = vld [vmem:[#allocation2 + $0x40] sm:$0xff]
    %v58 = vld [vmem:[#allocation2 + $0x48] sm:$0xff]
    %v59 = vld [vmem:[#allocation2 + $0x50] sm:$0xff]
    %v60 = vld [vmem:[#allocation2 + $0x58] sm:$0xff]
    %v61 = vld [vmem:[#allocation2 + $0x60] sm:$0xff]
    %v62 = vld [vmem:[#allocation2 + $0x68] sm:$0xff]
    %v63 = vld [vmem:[#allocation2 + $0x70] sm:$0xff]
    %v64 = vld [vmem:[#allocation2 + $0x78] sm:$0xff]
    %v65 = vld [vmem:[%s1] sm:$0xff]
    %v66 = vld [vmem:[#allocation4] sm:$0xff]
    %v67 = vld [vmem:[#allocation4 + $0x8] sm:$0xff]
    %v68 = vld [vmem:[#allocation4 + $0x10] sm:$0xff]
    %v69 = vld [vmem:[#allocation4 + $0x18] sm:$0xff]
    %v70 = vld [vmem:[#allocation4 + $0x20] sm:$0xff]
    %v71 = vld [vmem:[#allocation4 + $0x28] sm:$0xff]
    %v72 = vld [vmem:[#allocation4 + $0x30] sm:$0xff]
    %v73 = vld [vmem:[#allocation4 + $0x38] sm:$0xff]
    %v74 = vld [vmem:[#allocation4 + $0x40] sm:$0xff]
    %v75 = vld [vmem:[#allocation4 + $0x48] sm:$0xff]
    %v76 = vld [vmem:[#allocation4 + $0x50] sm:$0xff]
    %v77 = vld [vmem:[#allocation4 + $0x58] sm:$0xff]
    %v78 = vld [vmem:[#allocation4 + $0x60] sm:$0xff]
    %v79 = vld [vmem:[#allocation4 + $0x68] sm:$0xff]
    %v80 = vld [vmem:[#allocation4 + $0x70] sm:$0xff]
    %v81 = vld [vmem:[#allocation4 + $0x78] sm:$0xff]
    %82 = vmatprep.subr.mxu0 0.0
    %83 = vmatpush1.msra.mxu0 %v66
    %84 = vmatprep.subr.mxu0 0.0
    %85 = vmatpush1.msra.mxu0 %v67
    %86 = vmatprep.subr.mxu0 0.0
    %87 = vmatpush1.msra.mxu0 %v68
    %88 = vmatprep.subr.mxu0 0.0
    %89 = vmatpush1.msra.mxu0 %v69
    %90 = vmatprep.subr.mxu0 0.0
    %91 = vmatpush1.msra.mxu0 %v70
    %92 = vmatprep.subr.mxu0 0.0
    %93 = vmatpush1.msra.mxu0 %v71
    %94 = vmatprep.subr.mxu0 0.0
    %95 = vmatpush1.msra.mxu0 %v72
    %96 = vmatprep.subr.mxu0 0.0
    %97 = vmatpush1.msra.mxu0 %v73
    %98 = vmatprep.subr.mxu0 0.0
    %99 = vmatpush1.msra.mxu0 %v74
    %100 = vmatprep.subr.mxu0 0.0
    %101 = vmatpush1.msra.mxu0 %v75
    %102 = vmatprep.subr.mxu0 0.0
    %103 = vmatpush1.msra.mxu0 %v76
    %104 = vmatprep.subr.mxu0 0.0
    %105 = vmatpush1.msra.mxu0 %v77
    %106 = vmatprep.subr.mxu0 0.0
    %107 = vmatpush1.msra.mxu0 %v78
    %108 = vmatprep.subr.mxu0 0.0
    %109 = vmatpush1.msra.mxu0 %v79
    %110 = vmatprep.subr.mxu0 0.0
    %111 = vmatpush1.msra.mxu0 %v80
    %112 = vmatprep.subr.mxu0 0.0
    %113 = vmatpush1.msra.mxu0 %v81
    %114 = vmatprep.subr.mxu0 0.0
    %115 = vmatpush1.msra.mxu0 0.0
    %116 = vmatprep.subr.mxu0 0.0
    %117 = vmatpush1.msra.mxu0 0.0
    %118 = vmatprep.subr.mxu0 0.0
    %119 = vmatpush1.msra.mxu0 0.0
    %120 = vmatprep.subr.mxu0 0.0
    %121 = vmatpush1.msra.mxu0 0.0
    %122 = vmatprep.subr.mxu0 0.0
    %123 = vmatpush1.msra.mxu0 0.0
    %124 = vmatprep.subr.mxu0 0.0
    %125 = vmatpush1.msra.mxu0 0.0
    %126 = vmatprep.subr.mxu0 0.0
    %127 = vmatpush1.msra.mxu0 0.0
    %128 = vmatprep.subr.mxu0 0.0
    %129 = vmatpush1.msra.mxu0 0.0
    %130 = vmatprep.subr.mxu0 0.0
    %131 = vmatpush1.msra.mxu0 0.0
    %132 = vmatprep.subr.mxu0 0.0
    %133 = vmatpush1.msra.mxu0 0.0
    %134 = vmatprep.subr.mxu0 0.0
    %135 = vmatpush1.msra.mxu0 0.0
    %136 = vmatprep.subr.mxu0 0.0
    %137 = vmatpush1.msra.mxu0 0.0
    %138 = vmatprep.subr.mxu0 0.0
    %139 = vmatpush1.msra.mxu0 0.0
    %140 = vmatprep.subr.mxu0 0.0
    %141 = vmatpush1.msra.mxu0 0.0
    %142 = vmatprep.subr.mxu0 0.0
    %143 = vmatpush1.msra.mxu0 0.0
    %144 = vmatprep.subr.mxu0 0.0
    %145 = vmatpush1.msra.mxu0 0.0
    %146 = vmatprep.mubr.f32.mxu0 0.0
    %147 = vmatmul.mubr.f32.gmra.mrb[0].mxu0 %v65
    %v148 = vpop.f32.mrb[0].mxu0
    %v149 = vadd.f32 0.0, %v148
    %v150 = vpop.f32.mrb[0].mxu0
    %151 = vdwg.mxu0
    %152 = vmatprep.subr.mxu0 0.0
    %153 = vmatpush1.msra.mxu0 %v49
    %154 = vmatprep.subr.mxu0 0.0
    %155 = vmatpush1.msra.mxu0 %v50
    %156 = vmatprep.subr.mxu0 0.0
    %157 = vmatpush1.msra.mxu0 %v51
    %158 = vmatprep.subr.mxu0 0.0
    %159 = vmatpush1.msra.mxu0 %v52
    %160 = vmatprep.subr.mxu0 0.0
    %161 = vmatpush1.msra.mxu0 %v53
    %162 = vmatprep.subr.mxu0 0.0
    %163 = vmatpush1.msra.mxu0 %v54
    %164 = vmatprep.subr.mxu0 0.0
    %165 = vmatpush1.msra.mxu0 %v55
    %166 = vmatprep.subr.mxu0 0.0
    %167 = vmatpush1.msra.mxu0 %v56
    %168 = vmatprep.subr.mxu0 0.0
    %169 = vmatpush1.msra.mxu0 %v57
    %170 = vmatprep.subr.mxu0 0.0
    %171 = vmatpush1.msra.mxu0 %v58
    %172 = vmatprep.subr.mxu0 0.0
    %173 = vmatpush1.msra.mxu0 %v59
    %174 = vmatprep.subr.mxu0 0.0
    %175 = vmatpush1.msra.mxu0 %v60
    %176 = vmatprep.subr.mxu0 0.0
    %177 = vmatpush1.msra.mxu0 %v61
    %178 = vmatprep.subr.mxu0 0.0
    %179 = vmatpush1.msra.mxu0 %v62
    %180 = vmatprep.subr.mxu0 0.0
    %181 = vmatpush1.msra.mxu0 %v63
    %182 = vmatprep.subr.mxu0 0.0
    %183 = vmatpush1.msra.mxu0 %v64
    %184 = vmatprep.subr.mxu0 0.0
    %185 = vmatpush1.msra.mxu0 0.0
    %186 = vmatprep.subr.mxu0 0.0
    %187 = vmatpush1.msra.mxu0 0.0
    %188 = vmatprep.subr.mxu0 0.0
    %189 = vmatpush1.msra.mxu0 0.0
    %190 = vmatprep.subr.mxu0 0.0
    %191 = vmatpush1.msra.mxu0 0.0
    %192 = vmatprep.subr.mxu0 0.0
    %193 = vmatpush1.msra.mxu0 0.0
    %194 = vmatprep.subr.mxu0 0.0
    %195 = vmatpush1.msra.mxu0 0.0
    %196 = vmatprep.subr.mxu0 0.0
    %197 = vmatpush1.msra.mxu0 0.0
    %198 = vmatprep.subr.mxu0 0.0
    %199 = vmatpush1.msra.mxu0 0.0
    %200 = vmatprep.subr.mxu0 0.0
    %201 = vmatpush1.msra.mxu0 0.0
    %202 = vmatprep.subr.mxu0 0.0
    %203 = vmatpush1.msra.mxu0 0.0
    %204 = vmatprep.subr.mxu0 0.0
    %205 = vmatpush1.msra.mxu0 0.0
    %206 = vmatprep.subr.mxu0 0.0
    %207 = vmatpush1.msra.mxu0 0.0
    %208 = vmatprep.subr.mxu0 0.0
    %209 = vmatpush1.msra.mxu0 0.0
    %210 = vmatprep.subr.mxu0 0.0
    %211 = vmatpush1.msra.mxu0 0.0
    %212 = vmatprep.subr.mxu0 0.0
    %213 = vmatpush1.msra.mxu0 0.0
    %214 = vmatprep.subr.mxu0 0.0
    %215 = vmatpush1.msra.mxu0 0.0
    %216 = vmatprep.mubr.f32.mxu0 0.0
    %217 = vmatmul.mubr.f32.gmra.mrb[0].mxu0 %v48
    %v218 = vpop.f32.mrb[0].mxu0
    %v219 = vadd.f32 %v149, %v218
    %v220 = vpop.f32.mrb[0].mxu0
    %221 = vdwg.mxu0
    %v222 = vld [vmem:[%s4] sm:$0x1]
    %v224 = vlaneseq
    %v225 = vshrl.u32 %v224, 7
    %v226 = vsub.s32 0, %v225
    %v227 = vrot.slane %v222, %v226
    %v229 = vadd.f32 %v219, %v227
    %v230 = vtanh.pop %v229
    %231 = vst [vmem:[%s5] sm:$0xff] %v230
    // Predicated region
    $region30: #{rnn_cell_forward.1} parent=1 // pred_check
      _
    $region31: #{rnn_cell_forward.1} parent=1 // pred_check_branch
      %233 = sbr.rel (0) target = $region33
    $region32: #{rnn_cell_forward.1} parent=1 // pred_region
      _
    $region33: #{rnn_cell_forward.1} parent=1 // pred_fallthru
      _
    // Predicated region
    $region34: #{rnn_cell_forward.1} parent=1 // pred_check
      _
    $region35: #{rnn_cell_forward.1} parent=1 // pred_check_branch
      %235 = sbr.rel (0) target = $region37
    $region36: #{rnn_cell_forward.1} parent=1 // pred_region
      _
    $region37: #{rnn_cell_forward.1} parent=1 // pred_fallthru
      _
    %236 = vsyncpa [#allocation3], 1
    %237 = vsyncpa [#allocation5], 1

</llo_original>
